<compile_context>
chip_gen: v7x
topology: tpu7x:2x2x1
jax: 0.10.0
libtpu: 0.0.40
codegen_flags: <defaults>
</compile_context>

<pallas_src>
import math

import jax
import jax.numpy as jnp
from jax.experimental import pallas as pl
from jax.experimental.pallas import tpu as pltpu


def _cosine_annealing_kernel(params_ref, out_ref):
    # params_ref (SMEM, float32): [angle, a, b, active_flag]
    #   active:   out = a + b * cos(angle)
    #   inactive: out = 0
    active = params_ref[3] != 0.0

    @pl.when(active)
    def _():
        angle = jnp.full(out_ref.shape, params_ref[0], dtype=jnp.float32)
        out_ref[...] = params_ref[1] + params_ref[2] * jnp.cos(angle)

    @pl.when(jnp.logical_not(active))
    def _():
        out_ref[...] = jnp.zeros_like(out_ref)


@jax.jit
def _launch(params: jax.Array) -> jax.Array:
    out = pl.pallas_call(
        _cosine_annealing_kernel,
        out_shape=jax.ShapeDtypeStruct((1, 1), jnp.float32),
        in_specs=[pl.BlockSpec(memory_space=pltpu.MemorySpace.SMEM)],
        out_specs=pl.BlockSpec(memory_space=pltpu.MemorySpace.VMEM),
    )(params)
    return out[0, 0]


def cosine_annealing_scheduler(steps: int, duration: int,
                               min_: float = 0.0, gain: float = 1.0) -> jax.Array:
    """Returns the scheduler value (already scaled by `gain`) as a f32 scalar."""
    steps0 = steps - 1
    active = steps0 < duration
    # Host-side precompute: division only when active (avoids duration==0 NaN).
    angle = (math.pi * steps0 / duration) if active else 0.0
    a = gain * (min_ + (1.0 - min_) * 0.5)
    b = gain * (1.0 - min_) * 0.5
    params = jnp.array([angle, a, b, 1.0 if active else 0.0], dtype=jnp.float32)
    return _launch(params)


def _reference(steps: int, duration: int, min_: float, gain: float) -> float:
    steps0 = steps - 1
    if steps0 >= duration:
        return 0.0
    return gain * (min_ + (1.0 - min_)
                   * (1.0 + math.cos(math.pi * steps0 / duration)) / 2.0)


if __name__ == "__main__":
    # No tensor inputs in this module; PRNGKey(0) kept for determinism convention.
    _ = jax.random.PRNGKey(0)

    duration = 5
    min_ = 0.0
    gain = 1.0

    # Run the kernel once and block on the result.
    first = cosine_annealing_scheduler(1, duration, min_, gain)
    jax.block_until_ready(first)

    ok = True
    # Docstring schedule: 1.0, 0.904508, 0.654508, 0.345492, 0.095492, 0.0
    for s in range(1, 7):
        got = float(cosine_annealing_scheduler(s, duration, min_, gain))
        want = _reference(s, duration, min_, gain)
        if abs(got - want) > 1e-5:
            ok = False
            print(f"MISMATCH at steps={s}: got {got}, want {want}")

    # gain / min_ handling and the steps >= duration early-out.
    got = float(cosine_annealing_scheduler(3, 10, 0.2, 5.0))
    want = _reference(3, 10, 0.2, 5.0)
    if abs(got - want) > 1e-5:
        ok = False
        print(f"MISMATCH gain/min case: got {got}, want {want}")
    got = float(cosine_annealing_scheduler(12, 10, 0.2, 5.0))
    if abs(got - 0.0) > 1e-6:
        ok = False
        print(f"MISMATCH early-out case: got {got}, want 0.0")
    # duration edge: steps0 >= duration with duration small (no NaN possible).
    got = float(cosine_annealing_scheduler(2, 1, 0.0, 1.0))
    if abs(got - 0.0) > 1e-6:
        ok = False
        print(f"MISMATCH duration edge: got {got}, want 0.0")

    if ok:
        print("KERNEL_OK")
</pallas_src>

<mosaic_0001>
module attributes {stable_mosaic.version = 11 : i64} {
  func.func @_cosine_annealing_kernel(%arg0: memref<4xf32, #tpu.memory_space<smem>>, %arg1: memref<1x1xf32, #tpu.memory_space<vmem>>) attributes {dimension_semantics = [], scalar_prefetch = 0 : i64, scratch_operands = 0 : i64, tpu.core_type = #tpu.core_type<tc>} {
    %c3 = arith.constant 3 : index
    %0 = memref.load %arg0[%c3] : memref<4xf32, #tpu.memory_space<smem>>
    %cst = arith.constant 0.000000e+00 : f32
    %1 = arith.cmpf one, %0, %cst : f32
    %2 = arith.extui %1 : i1 to i32
    %c0_i32 = arith.constant 0 : i32
    %3 = arith.cmpi ne, %2, %c0_i32 : i32
    scf.if %3 {
      %c0 = arith.constant 0 : index
      %7 = memref.load %arg0[%c0] : memref<4xf32, #tpu.memory_space<smem>>
      %8 = vector.broadcast %7 : f32 to vector<1x1xf32>
      %c1 = arith.constant 1 : index
      %9 = memref.load %arg0[%c1] : memref<4xf32, #tpu.memory_space<smem>>
      %c2 = arith.constant 2 : index
      %10 = memref.load %arg0[%c2] : memref<4xf32, #tpu.memory_space<smem>>
      %11 = math.cos %8 : vector<1x1xf32>
      %12 = vector.broadcast %10 : f32 to vector<1x1xf32>
      %13 = arith.mulf %12, %11 : vector<1x1xf32>
      %14 = vector.broadcast %9 : f32 to vector<1x1xf32>
      %15 = arith.addf %14, %13 : vector<1x1xf32>
      %c0_1 = arith.constant 0 : index
      %c0_2 = arith.constant 0 : index
      %16 = vector.load %arg1[%c0_1, %c0_2] : memref<1x1xf32, #tpu.memory_space<vmem>>, vector<1x1xf32>
      tpu.vector_store %arg1[%c0_1, %c0_2], %15 {strides = array<i32>} : memref<1x1xf32, #tpu.memory_space<vmem>>, vector<1x1xf32>,
    } else {
    }
    %true = arith.constant true
    %4 = arith.xori %1, %true : i1
    %5 = arith.extui %4 : i1 to i32
    %c0_i32_0 = arith.constant 0 : i32
    %6 = arith.cmpi ne, %5, %c0_i32_0 : i32
    scf.if %6 {
      %cst_1 = arith.constant 0.000000e+00 : f32
      %7 = vector.broadcast %cst_1 : f32 to vector<1x1xf32>
      %c0 = arith.constant 0 : index
      %c0_2 = arith.constant 0 : index
      %8 = vector.load %arg1[%c0, %c0_2] : memref<1x1xf32, #tpu.memory_space<vmem>>, vector<1x1xf32>
      tpu.vector_store %arg1[%c0, %c0_2], %7 {strides = array<i32>} : memref<1x1xf32, #tpu.memory_space<vmem>>, vector<1x1xf32>,
    } else {
    }
    return
  }
}

</mosaic_0001>

<llo_original>
// kernel: _launch.1
$region0: #{_launch.1}
  #allocation0 [shape = 'u32[]', space=smem, size = 0x4, offset = 0x4, fixed_abs, tag = 'smem constant byte address 0x4 - core index']
  #allocation1 [shape = 'u32[144,128]{1,0:T(1,128)}', space=vmem, size = 0x12000, scoped, tag = 'internal scratch']
  %s0 = inlined_call_operand.hbm [shape: f32[4], index: 0, kind: input, shape index: {}]
  %s1 = inlined_call_operand.hbm [shape: f32[1,1], index: 1, kind: output, shape index: {}]
  %s2 = sld [smem:[#allocation0]]
  $region26: #{_launch.1} parent=0
    _
  %s4 = ssub.s32 1, %s2
  %s5 = scalar_select 0, %s4, %s2
  $region1: #{_launch.1} parent=0
    #allocation2 [shape = 'u8[512]{0}', space=smem, size = 0x200, scoped, tag = 'input window, operand 0, single buffered']
    #allocation3 [shape = 's32[1]{0}', space=sflag, size = 0x4, scoped, tag = 'scoped memory for _launch.1']
    #allocation4 [shape = 's32[1]{0}', space=sflag, size = 0x4, scoped, tag = 'scoped memory for _launch.1']
    #allocation5 [shape = 'u8[512]{0}', space=vmem, size = 0x400, scoped, tag = 'output window, operand 0, single buffered']
    %6 = vsyncpa [#allocation4], 0
    %7 = vsyncpa [#allocation3], 0
    // Predicated region
    $region2: #{_launch.1} parent=1 // pred_check
      _
    $region3: #{_launch.1} parent=1 // pred_check_branch
      %9 = sbr.rel (0) target = $region5
    $region4: #{_launch.1} parent=1 // pred_region
      %s11 = ssub.s32 16, 16
      %12 = vsyncadd [#allocation4], %s11
      %15 = dma.hbm_to_smem %s0, 16, [#allocation2], [#allocation4]
    $region5: #{_launch.1} parent=1 // pred_fallthru
      _
    // Predicated region
    $region6: #{_launch.1} parent=1 // pred_check
      _
    $region7: #{_launch.1} parent=1 // pred_check_branch
      %17 = sbr.rel (0) target = $region9
    $region8: #{_launch.1} parent=1 // pred_region
      %18 = dma.done [#allocation4], 16
    $region9: #{_launch.1} parent=1 // pred_fallthru
      _
    %19 = sfence
    %s20 = sld [smem:[#allocation2 + $0x3]]
    %p21 = scmp.ne.f32.partialorder %s20, 0.0
    // Predicated region
    $region10: #{_launch.1} parent=1 // pred_check
      %p22 = pneg %p21
    $region11: #{_launch.1} parent=1 // pred_check_branch
      %24 = sbr.rel (%p22) target = $region13
    $region12: #{_launch.1} parent=1 // pred_region
      %s25 = sld [smem:[#allocation2]]
      %v26 = vstv %s25
      %s27 = sld [smem:[#allocation2 + $0x1]]
      %s28 = sld [smem:[#allocation2 + $0x2]]
      %v29 = vand.u32 2147483647, %v26
      %vm30 = vcmp.le.f32.partialorder %v29, 0.7853982
      %vm31 = vcmp.lt.s32.totalorder %v26, 0
      %v32 = vand.u32 %v26, 2139095040
      %v33 = vshrl.u32 %v32, 23
      %v34 = vsub.s32 %v33, 127
      %v35 = vand.u32 2147483647, %v26
      %v36 = vand.u32 %v35, 8388607
      %v37 = vor.u32 %v36, 8388608
      %v38 = vsub.s32 0, %v37
      %v39 = vadd.s32 %v34, 1
      %vm40 = vcmp.gt.s32.totalorder %v39, 0
      %v41 = vsel %vm40, %v39, 0
      %v42 = vshrl.u32 %v41, 5
      %v43 = vand.u32 %v41, 31
      %v44 = vsub.s32 32, %v43
      %v45 = vshrl.u32 683565275, %v44
      %v46 = vshll.u32 683565275, %v43
      %v47 = vshrl.u32 2475754826, %v44
      %v48 = vor.u32 %v46, %v47
      %v49 = vshll.u32 2475754826, %v43
      %v50 = vshrl.u32 2131351028, %v44
      %v51 = vor.u32 %v49, %v50
      %v52 = vshll.u32 2131351028, %v43
      %v53 = vshrl.u32 2102212464, %v44
      %v54 = vor.u32 %v52, %v53
      %v55 = vshll.u32 2102212464, %v43
      %v56 = vshrl.u32 920167782, %v44
      %v57 = vor.u32 %v55, %v56
      %v58 = vshll.u32 920167782, %v43
      %v59 = vshrl.u32 1326507024, %v44
      %v60 = vor.u32 %v58, %v59
      %vm61 = vcmp.lt.s32.totalorder %v42, 1
      %vm62 = vcmp.lt.s32.totalorder %v42, 2
      %vm63 = vcmp.lt.s32.totalorder %v42, 3
      %vm64 = vcmp.lt.s32.totalorder %v42, 4
      %v65 = vsel %vm61, %v45, %v48
      %v66 = vsel %vm64, %v54, 2102212464
      %v67 = vsel %vm63, %v51, %v66
      %v68 = vsel %vm62, %v65, %v67
      %v69 = vsel %vm61, %v48, %v51
      %v70 = vsel %vm64, %v57, 920167782
      %v71 = vsel %vm63, %v54, %v70
      %v72 = vsel %vm62, %v69, %v71
      %v73 = vsel %vm61, %v51, %v54
      %v74 = vsel %vm64, %v60, 1326507024
      %v75 = vsel %vm63, %v57, %v74
      %v76 = vsel %vm62, %v73, %v75
      %v77 = vshll.u32 %v37, 8
      %v78 = vmul.u32.u64.compose %v77, %v76
      %v79 = vextract.low.u32 %v78
      %v80 = vextract.high.u32 %v78
      %v81 = vmul.u32.u64.compose %v77, %v72
      %v82 = vextract.low.u32 %v81
      %v83 = vextract.high.u32 %v81
      %v84 = vmul.u32 %v77, %v68
      %v85 = vadd.s32 %v80, %v82
      %vm86 = vc.u32 %v80, %v82
      %v87 = vadd.s32 %v83, 1
      %v88 = vsel %vm86, %v87, %v83
      %v89 = vadd.s32 %v84, %v88
      %v90 = vadd.s32 %v89, 536870912
      %v91 = vshrl.u32 %v90, 30
      %v92 = vshll.u32 %v91, 30
      %v93 = vsub.s32 %v89, %v92
      %vm94 = vcmp.lt.s32.totalorder %v93, 0
      %v95 = vsub.s32 0, %v93
      %v96 = vsel %vm94, %v95, %v93
      %v97 = vclz %v96
      %v98 = vsub.s32 %v97, 2
      %vm99 = vcmp.gt.s32.totalorder 0, %v98
      %v100 = vsel %vm99, 0, %v98
      %v101 = vsub.s32 32, %v100
      %v102 = vshll.u32 %v93, %v100
      %v103 = vshrl.u32 %v85, %v101
      %v104 = vor.u32 %v102, %v103
      %v105 = vsub.s32 4294967266, %v100
      %v106 = vadd.s32 %v105, 127
      %v107 = vshll.u32 %v106, 23
      %v108 = vor.u32 4788187, %v107
      %v109 = vand.u32 2147483647, %v108
      %v111 = vcvt.s32.f32 %v104
      %v112 = vmul.f32 %v111, %v109
      %v113 = vxor.u32 %v112, 2147483648
      %v114 = vsel %vm31, %v113, %v112
      %v115 = vsub.s32 4, %v91
      %v116 = vsel %vm31, %v115, %v91
      %v117 = vsel %vm30, %v26, %v114
      %v118 = vsel %vm30, 0, %v116
      %v119 = vcosq.f32.pop %v117
      %v120 = vsinq.f32.pop %v117
      %vm121 = vweird.f32 %v26
      %v122 = vand.u32 %v118, 3
      %vm123 = vcmp.lt.s32.totalorder %v122, 2
      %vm124 = vcmp.eq.s32.totalorder %v122, 0
      %v125 = vxor.u32 %v120, 2147483648
      %v126 = vsel %vm124, %v119, %v125
      %vm127 = vcmp.eq.s32.totalorder %v122, 2
      %v128 = vxor.u32 %v119, 2147483648
      %v129 = vsel %vm127, %v128, %v120
      %v130 = vsel %vm123, %v126, %v129
      %v131 = vsel %vm121, nan, %v130
      %v132 = vstv %s28
      %v133 = vmul.f32 %v132, %v131
      %v134 = vstv %s27
      %v135 = vadd.f32 %v134, %v133
      %vm136 = vcmask 0
      %137 = vst.msk [vmem:[#allocation5] sm:$0x1] %vm136, %v135
    $region13: #{_launch.1} parent=1 // pred_fallthru
      _
    %p138 = pneg %p21
    // Predicated region
    $region14: #{_launch.1} parent=1 // pred_check
      _
    $region15: #{_launch.1} parent=1 // pred_check_branch
      %140 = sbr.rel (%p21) target = $region17
    $region16: #{_launch.1} parent=1 // pred_region
      %vm141 = vcmask 0
      %142 = vst.msk [vmem:[#allocation5] sm:$0x1] %vm141, 0.0
    $region17: #{_launch.1} parent=1 // pred_fallthru
      _
    // Predicated region
    $region18: #{_launch.1} parent=1 // pred_check
      _
    $region19: #{_launch.1} parent=1 // pred_check_branch
      %144 = sbr.rel (0) target = $region21
    $region20: #{_launch.1} parent=1 // pred_region
      %s146 = ssub.s32 16, 16
      %147 = vsyncadd [#allocation3], %s146
      %s149 = sshll.u32 [#allocation5], 4
      %s150 = int_to_ptr.vmem [resolvable:$true] %s149
      %152 = dma.vmem_to_hbm [thread:$0]  %s150, 16, %s1, [#allocation3]
    $region21: #{_launch.1} parent=1 // pred_fallthru
      _
    // Predicated region
    $region22: #{_launch.1} parent=1 // pred_check
      _
    $region23: #{_launch.1} parent=1 // pred_check_branch
      %154 = sbr.rel (0) target = $region25
    $region24: #{_launch.1} parent=1 // pred_region
      %155 = dma.done [#allocation3], 16
    $region25: #{_launch.1} parent=1 // pred_fallthru
      _
    %156 = vsyncpa [#allocation3], 1
    %157 = vsyncpa [#allocation4], 1

</llo_original>
